<compile_context>
chip_gen: v7x
topology: tpu7x:2x2x1
jax: 0.10.0
libtpu: 0.0.40
codegen_flags: <defaults>
</compile_context>

<pallas_src>
import functools

import jax
import jax.numpy as jnp
from jax.experimental import pallas as pl
from jax.experimental.pallas import tpu as pltpu

LANE = 128   # lane-dense padded width of the last matmul
HID1 = 128
HID2 = 64


def _log_sigmoid(x):
    # Numerically stable logsigmoid(x) = min(x, 0) - log1p(exp(-|x|))
    return jnp.minimum(x, 0.0) - jnp.log1p(jnp.exp(-jnp.abs(x)))


def mlp_kernel(x_ref, w1_ref, w2_ref, w3_ref, bias_ref, out_ref, *, output_size):
    x = x_ref[...]                                  # (block_b, input_size) f32

    b1 = bias_ref[0:1, :HID1]                       # (1, 128)
    b2 = bias_ref[1:2, :HID2]                       # (1, 64)
    b3 = bias_ref[2:3, :LANE]                       # (1, 128), zero-padded

    # fc1 / fc2 (+ bias) + LogSigmoid, f32 accumulation on the MXU.
    h1 = _log_sigmoid(
        jnp.dot(x, w1_ref[...], preferred_element_type=jnp.float32) + b1)
    h2 = _log_sigmoid(
        jnp.dot(h1, w2_ref[...], preferred_element_type=jnp.float32) + b2)

    # fc3 pre-activation (lane-padded to 128).
    z3 = jnp.dot(h2, w3_ref[...], preferred_element_type=jnp.float32) + b3

    # softmax(logsigmoid(z)) == sigmoid(z) / sum_j sigmoid(z_j)
    # Overflow-safe sigmoid: t = exp(-|z|) in (0,1],
    #   sigmoid(z) = 1/(1+t) if z >= 0 else t/(1+t)   (shared reciprocal)
    t = jnp.exp(-jnp.abs(z3))
    d = 1.0 + t
    r = pl.reciprocal(d, approx=True)               # EUP
    r = r * (2.0 - d * r)                           # 1 Newton step (VPU)
    s = jnp.where(z3 >= 0.0, r, t * r)              # sigmoid(z3)

    # Padded lanes have z3 == 0 -> sigmoid 0.5; force them to 0 before the sum.
    col = jax.lax.broadcasted_iota(jnp.int32, s.shape, 1)
    s = jnp.where(col < output_size, s, 0.0)

    row_sum = jnp.sum(s, axis=1, keepdims=True)
    inv = pl.reciprocal(row_sum, approx=True)
    inv = inv * (2.0 - row_sum * inv)               # 1 Newton step

    # Compact store: only the real output_size columns hit HBM.
    out_ref[...] = (s * inv)[:, :output_size].astype(out_ref.dtype)


def pack_params(params, output_size):
    """One-time packing: lane-pad w3 and pack the three biases into (3,128)."""
    w1, b1, w2, b2, w3, b3 = params

    w3p = jnp.zeros((HID2, LANE), jnp.float32).at[:, :output_size].set(w3)

    bias = jnp.zeros((3, LANE), jnp.float32)
    bias = bias.at[0, :HID1].set(b1.reshape(-1))
    bias = bias.at[1, :HID2].set(b2.reshape(-1))
    bias = bias.at[2, :output_size].set(b3.reshape(-1))

    return (w1, w2, w3p, bias)


def my_model_forward(x, packed_params, output_size, *, block_b=2048):
    """Full forward pass in one Pallas kernel, gridded over the batch."""
    w1, w2, w3p, bias = packed_params
    batch, input_size = x.shape

    # Batch block: multiple of 8, at most `block_b`, at most padded batch,
    # and (for v7x megacore) capped so the grid has >= 2 steps when the batch
    # is large enough to split at sublane granularity.
    def _round_up8(n):
        return ((n + 7) // 8) * 8

    half = _round_up8((batch + 1) // 2)
    block_b = max(8, min(block_b, 4096))
    block_b = min(block_b, max(8, half))
    block_b = min(block_b, _round_up8(batch))
    block_b = _round_up8(block_b)

    batch_p = ((batch + block_b - 1) // block_b) * block_b
    if batch_p != batch:
        x = jnp.pad(x, ((0, batch_p - batch), (0, 0)))
    grid = (batch_p // block_b,)

    # Advisory cost hint so XLA can schedule/overlap this call.
    flops = 2 * batch_p * (input_size * HID1 + HID1 * HID2 + HID2 * LANE)
    transcendentals = batch_p * (2 * HID1 + 2 * HID2 + 2 * LANE)
    bytes_accessed = 4 * (x.size + w1.size + w2.size + w3p.size
                          + bias.size + batch_p * output_size)

    kernel = functools.partial(mlp_kernel, output_size=output_size)

    out = pl.pallas_call(
        kernel,
        out_shape=jax.ShapeDtypeStruct((batch_p, output_size), jnp.float32),
        grid=grid,
        in_specs=[
            # x: tiled over batch
            pl.BlockSpec((block_b, input_size), lambda i: (i, 0)),
            # weights / packed biases: constant block index -> VMEM-resident
            pl.BlockSpec((input_size, HID1), lambda i: (0, 0)),
            pl.BlockSpec((HID1, HID2), lambda i: (0, 0)),
            pl.BlockSpec((HID2, LANE), lambda i: (0, 0)),
            pl.BlockSpec((3, LANE), lambda i: (0, 0)),
        ],
        out_specs=pl.BlockSpec((block_b, output_size), lambda i: (i, 0)),
        compiler_params=pltpu.CompilerParams(
            dimension_semantics=("parallel",)),
        cost_estimate=pl.CostEstimate(
            flops=flops,
            transcendentals=transcendentals,
            bytes_accessed=bytes_accessed),
    )(x, w1, w2, w3p, bias)

    if batch_p != batch:
        out = out[:batch]
    return out


def init_params(key, input_size, output_size):
    """PyTorch-Linear-style init; W stored transposed as [in, out], b as [1, out]."""
    k1, k2, k3, k4, k5, k6 = jax.random.split(key, 6)

    def linear(kw, kb, fan_in, fan_out):
        bound = 1.0 / jnp.sqrt(fan_in)
        w = jax.random.uniform(kw, (fan_in, fan_out), jnp.float32, -bound, bound)
        b = jax.random.uniform(kb, (1, fan_out), jnp.float32, -bound, bound)
        return w, b

    w1, b1 = linear(k1, k2, input_size, HID1)
    w2, b2 = linear(k3, k4, HID1, HID2)
    w3, b3 = linear(k5, k6, HID2, output_size)
    return (w1, b1, w2, b2, w3, b3)


def reference_forward(x, params):
    """Pure-JAX reference for correctness check."""
    w1, b1, w2, b2, w3, b3 = params
    h = jax.nn.log_sigmoid(x @ w1 + b1)
    h = jax.nn.log_sigmoid(h @ w2 + b2)
    h = jax.nn.log_sigmoid(h @ w3 + b3)
    return jax.nn.softmax(h, axis=1)


if __name__ == "__main__":
    input_size = 32
    output_size = 10
    batch = 8

    key = jax.random.PRNGKey(0)
    kx, kp = jax.random.split(key)
    x = jax.random.normal(kx, (batch, input_size), jnp.float32)
    params = init_params(kp, input_size, output_size)

    # One-time packing (hoisted out of the forward pass).
    packed = pack_params(params, output_size)

    out = my_model_forward(x, packed, output_size)
    out = jax.block_until_ready(out)

    ref = reference_forward(x, params)
    assert out.shape == (batch, output_size)
    # Tolerance accounts for the EUP approximate reciprocals (+1 Newton step).
    assert jnp.allclose(out, ref, atol=1e-4, rtol=1e-4)
    assert jnp.allclose(jnp.sum(out, axis=1), 1.0, atol=1e-4)

    print("KERNEL_OK")
</pallas_src>

<mosaic_0001>
module attributes {stable_mosaic.version = 11 : i64} {
  func.func @mlp_kernel(%arg0: i32, %arg1: memref<8x32xf32, #tpu.memory_space<vmem>>, %arg2: memref<32x128xf32, #tpu.memory_space<vmem>>, %arg3: memref<128x64xf32, #tpu.memory_space<vmem>>, %arg4: memref<64x128xf32, #tpu.memory_space<vmem>>, %arg5: memref<3x128xf32, #tpu.memory_space<vmem>>, %arg6: memref<8x10xf32, #tpu.memory_space<vmem>>) attributes {dimension_semantics = [#tpu.dimension_semantics<parallel>], iteration_bounds = array<i64: 1>, scalar_prefetch = 0 : i64, scratch_operands = 0 : i64, tpu.core_type = #tpu.core_type<tc>, window_params = [{transform_indices = @transform_0, window_bounds = array<i64: 8, 32>}, {pipeline_mode = #tpu.pipeline_mode<synchronous>, transform_indices = @transform_1, window_bounds = array<i64: 32, 128>}, {pipeline_mode = #tpu.pipeline_mode<synchronous>, transform_indices = @transform_2, window_bounds = array<i64: 128, 64>}, {pipeline_mode = #tpu.pipeline_mode<synchronous>, transform_indices = @transform_3, window_bounds = array<i64: 64, 128>}, {pipeline_mode = #tpu.pipeline_mode<synchronous>, transform_indices = @transform_4, window_bounds = array<i64: 3, 128>}, {transform_indices = @transform_5, window_bounds = array<i64: 8, 10>}]} {
    %c0 = arith.constant 0 : index
    %c0_0 = arith.constant 0 : index
    %0 = vector.load %arg1[%c0, %c0_0] : memref<8x32xf32, #tpu.memory_space<vmem>>, vector<8x32xf32>
    %c0_1 = arith.constant 0 : index
    %c0_2 = arith.constant 0 : index
    %1 = vector.load %arg5[%c0_1, %c0_2] : memref<3x128xf32, #tpu.memory_space<vmem>>, vector<1x128xf32>
    %c1 = arith.constant 1 : index
    %c0_3 = arith.constant 0 : index
    %2 = vector.load %arg5[%c1, %c0_3] : memref<3x128xf32, #tpu.memory_space<vmem>>, vector<1x64xf32>
    %c2 = arith.constant 2 : index
    %c0_4 = arith.constant 0 : index
    %3 = vector.load %arg5[%c2, %c0_4] : memref<3x128xf32, #tpu.memory_space<vmem>>, vector<1x128xf32>
    %c0_5 = arith.constant 0 : index
    %c0_6 = arith.constant 0 : index
    %4 = vector.load %arg2[%c0_5, %c0_6] : memref<32x128xf32, #tpu.memory_space<vmem>>, vector<32x128xf32>
    %cst = arith.constant dense<0.000000e+00> : vector<8x128xf32>
    %5 = tpu.matmul %0, %4, %cst {dimension_numbers = #tpu.dot_dimension_numbers<[1], [0], [0], [1], [0, 0, 1, 1], [], []>} : vector<8x32xf32>, vector<32x128xf32>, vector<8x128xf32> -> vector<8x128xf32>
    %6 = vector.broadcast %1 : vector<1x128xf32> to vector<8x128xf32>
    %7 = arith.addf %5, %6 : vector<8x128xf32>
    %cst_7 = arith.constant 0.000000e+00 : f32
    %8 = vector.broadcast %cst_7 : f32 to vector<8x128xf32>
    %9 = arith.minimumf %7, %8 : vector<8x128xf32>
    %10 = math.absf %7 : vector<8x128xf32>
    %cst_8 = arith.constant 0.000000e+00 : f32
    %11 = vector.broadcast %cst_8 : f32 to vector<8x128xf32>
    %12 = arith.subf %11, %10 : vector<8x128xf32>
    %13 = math.exp %12 : vector<8x128xf32>
    %14 = math.log1p %13 : vector<8x128xf32>
    %15 = arith.subf %9, %14 : vector<8x128xf32>
    %c0_9 = arith.constant 0 : index
    %c0_10 = arith.constant 0 : index
    %16 = vector.load %arg3[%c0_9, %c0_10] : memref<128x64xf32, #tpu.memory_space<vmem>>, vector<128x64xf32>
    %cst_11 = arith.constant dense<0.000000e+00> : vector<8x64xf32>
    %17 = tpu.matmul %15, %16, %cst_11 {dimension_numbers = #tpu.dot_dimension_numbers<[1], [0], [0], [1], [0, 0, 1, 1], [], []>} : vector<8x128xf32>, vector<128x64xf32>, vector<8x64xf32> -> vector<8x64xf32>
    %18 = vector.broadcast %2 : vector<1x64xf32> to vector<8x64xf32>
    %19 = arith.addf %17, %18 : vector<8x64xf32>
    %cst_12 = arith.constant 0.000000e+00 : f32
    %20 = vector.broadcast %cst_12 : f32 to vector<8x64xf32>
    %21 = arith.minimumf %19, %20 : vector<8x64xf32>
    %22 = math.absf %19 : vector<8x64xf32>
    %cst_13 = arith.constant 0.000000e+00 : f32
    %23 = vector.broadcast %cst_13 : f32 to vector<8x64xf32>
    %24 = arith.subf %23, %22 : vector<8x64xf32>
    %25 = math.exp %24 : vector<8x64xf32>
    %26 = math.log1p %25 : vector<8x64xf32>
    %27 = arith.subf %21, %26 : vector<8x64xf32>
    %c0_14 = arith.constant 0 : index
    %c0_15 = arith.constant 0 : index
    %28 = vector.load %arg4[%c0_14, %c0_15] : memref<64x128xf32, #tpu.memory_space<vmem>>, vector<64x128xf32>
    %cst_16 = arith.constant dense<0.000000e+00> : vector<8x128xf32>
    %29 = tpu.matmul %27, %28, %cst_16 {dimension_numbers = #tpu.dot_dimension_numbers<[1], [0], [0], [1], [0, 0, 1, 1], [], []>} : vector<8x64xf32>, vector<64x128xf32>, vector<8x128xf32> -> vector<8x128xf32>
    %30 = vector.broadcast %3 : vector<1x128xf32> to vector<8x128xf32>
    %31 = arith.addf %29, %30 : vector<8x128xf32>
    %32 = math.absf %31 : vector<8x128xf32>
    %cst_17 = arith.constant 0.000000e+00 : f32
    %33 = vector.broadcast %cst_17 : f32 to vector<8x128xf32>
    %34 = arith.subf %33, %32 : vector<8x128xf32>
    %35 = math.exp %34 : vector<8x128xf32>
    %cst_18 = arith.constant 1.000000e+00 : f32
    %36 = vector.broadcast %cst_18 : f32 to vector<8x128xf32>
    %37 = arith.addf %36, %35 : vector<8x128xf32>
    %38 = tpu.reciprocal %37 {approx = true} : vector<8x128xf32> -> vector<8x128xf32>
    %39 = arith.mulf %37, %38 : vector<8x128xf32>
    %cst_19 = arith.constant 2.000000e+00 : f32
    %40 = vector.broadcast %cst_19 : f32 to vector<8x128xf32>
    %41 = arith.subf %40, %39 : vector<8x128xf32>
    %42 = arith.mulf %38, %41 : vector<8x128xf32>
    %cst_20 = arith.constant 0.000000e+00 : f32
    %43 = vector.broadcast %cst_20 : f32 to vector<8x128xf32>
    %44 = arith.cmpf oge, %31, %43 : vector<8x128xf32>
    %45 = arith.mulf %35, %42 : vector<8x128xf32>
    %46 = arith.select %44, %42, %45 : vector<8x128xi1>, vector<8x128xf32>
    %47 = tpu.iota {dimensions = array<i32: 1>} : vector<8x128xi32>
    %c10_i32 = arith.constant 10 : i32
    %48 = vector.broadcast %c10_i32 : i32 to vector<8x128xi32>
    %49 = arith.cmpi slt, %47, %48 : vector<8x128xi32>
    %cst_21 = arith.constant 0.000000e+00 : f32
    %50 = vector.broadcast %cst_21 : f32 to vector<8x128xf32>
    %51 = arith.select %49, %46, %50 : vector<8x128xi1>, vector<8x128xf32>
    %cst_22 = arith.constant dense<0.000000e+00> : vector<8xf32>
    %52 = vector.multi_reduction <add>, %51, %cst_22 [1] : vector<8x128xf32> to vector<8xf32>
    %53 = vector.shape_cast %52 : vector<8xf32> to vector<8x1xf32>
    %54 = tpu.reciprocal %53 {approx = true} : vector<8x1xf32> -> vector<8x1xf32>
    %55 = arith.mulf %53, %54 : vector<8x1xf32>
    %cst_23 = arith.constant 2.000000e+00 : f32
    %56 = vector.broadcast %cst_23 : f32 to vector<8x1xf32>
    %57 = arith.subf %56, %55 : vector<8x1xf32>
    %58 = arith.mulf %54, %57 : vector<8x1xf32>
    %59 = vector.broadcast %58 : vector<8x1xf32> to vector<8x128xf32>
    %60 = arith.mulf %51, %59 : vector<8x128xf32>
    %61 = vector.extract_strided_slice %60 {offsets = [0, 0], sizes = [8, 10], strides = [1, 1]} : vector<8x128xf32> to vector<8x10xf32>
    %c0_24 = arith.constant 0 : index
    %c0_25 = arith.constant 0 : index
    %62 = vector.load %arg6[%c0_24, %c0_25] : memref<8x10xf32, #tpu.memory_space<vmem>>, vector<8x10xf32>
    tpu.vector_store %arg6[%c0_24, %c0_25], %61 {strides = array<i32>} : memref<8x10xf32, #tpu.memory_space<vmem>>, vector<8x10xf32>,
    return
  }
  func.func @transform_0(%arg0: i32) -> (i32, i32) {
    %c0_i32 = arith.constant 0 : i32
    %c0_i32_0 = arith.constant 0 : i32
    return %arg0, %c0_i32 : i32, i32
  }
  func.func @transform_1(%arg0: i32) -> (i32, i32) {
    %c0_i32 = arith.constant 0 : i32
    %c0_i32_0 = arith.constant 0 : i32
    %c0_i32_1 = arith.constant 0 : i32
    return %c0_i32, %c0_i32_0 : i32, i32
  }
  func.func @transform_2(%arg0: i32) -> (i32, i32) {
    %c0_i32 = arith.constant 0 : i32
    %c0_i32_0 = arith.constant 0 : i32
    %c0_i32_1 = arith.constant 0 : i32
    return %c0_i32, %c0_i32_0 : i32, i32
  }
  func.func @transform_3(%arg0: i32) -> (i32, i32) {
    %c0_i32 = arith.constant 0 : i32
    %c0_i32_0 = arith.constant 0 : i32
    %c0_i32_1 = arith.constant 0 : i32
    return %c0_i32, %c0_i32_0 : i32, i32
  }
  func.func @transform_4(%arg0: i32) -> (i32, i32) {
    %c0_i32 = arith.constant 0 : i32
    %c0_i32_0 = arith.constant 0 : i32
    %c0_i32_1 = arith.constant 0 : i32
    return %c0_i32, %c0_i32_0 : i32, i32
  }
  func.func @transform_5(%arg0: i32) -> (i32, i32) {
    %c0_i32 = arith.constant 0 : i32
    %c0_i32_0 = arith.constant 0 : i32
    return %arg0, %c0_i32 : i32, i32
  }
}

</mosaic_0001>

<llo_original>
// kernel: tpu_custom_call.1
$region0: #{tpu_custom_call.1}
  #allocation0 [shape = 'u32[]', space=smem, size = 0x4, offset = 0x4, fixed_abs, tag = 'smem constant byte address 0x4 - core index']
  #allocation1 [shape = 'u32[144,128]{1,0:T(1,128)}', space=vmem, size = 0x12000, scoped, tag = 'internal scratch']
  %s0 = inlined_call_operand.vmem [shape: f32[8,32], index: 0, kind: input, shape index: {}]
  %s1 = inlined_call_operand.vmem [shape: f32[32,128], index: 1, kind: input, shape index: {}]
  %s2 = inlined_call_operand.vmem [shape: f32[128,64], index: 2, kind: input, shape index: {}]
  %s3 = inlined_call_operand.vmem [shape: f32[64,128], index: 3, kind: input, shape index: {}]
  %s4 = inlined_call_operand.vmem [shape: f32[3,128], index: 4, kind: input, shape index: {}]
  %s5 = inlined_call_operand.hbm [shape: f32[8,10], index: 5, kind: output, shape index: {}]
  %s6 = sld [smem:[#allocation0]]
  $region30: #{tpu_custom_call.1} parent=0
    _
  %s8 = ssub.s32 1, %s6
  %s9 = scalar_select 0, %s8, %s6
  $region1: #{tpu_custom_call.1} parent=0
    #allocation2 [shape = 'u8[4096]{0}', space=vmem, size = 0x1000, scoped, tag = 'output window, operand 0, single buffered']
    #allocation3 [shape = 's32[1]{0}', space=sflag, size = 0x4, scoped, tag = 'scoped memory for tpu_custom_call.1']
    %10 = vsyncpa [#allocation3], 0
    // Predicated region
    $region2: #{tpu_custom_call.1} parent=1 // pred_check
      _
    $region3: #{tpu_custom_call.1} parent=1 // pred_check_branch
      %12 = sbr.rel (0) target = $region5
    $region4: #{tpu_custom_call.1} parent=1 // pred_region
      _
    $region5: #{tpu_custom_call.1} parent=1 // pred_fallthru
      _
    // Predicated region
    $region6: #{tpu_custom_call.1} parent=1 // pred_check
      _
    $region7: #{tpu_custom_call.1} parent=1 // pred_check_branch
      %14 = sbr.rel (0) target = $region9
    $region8: #{tpu_custom_call.1} parent=1 // pred_region
      _
    $region9: #{tpu_custom_call.1} parent=1 // pred_fallthru
      _
    // Predicated region
    $region10: #{tpu_custom_call.1} parent=1 // pred_check
      _
    $region11: #{tpu_custom_call.1} parent=1 // pred_check_branch
      %16 = sbr.rel (0) target = $region13
    $region12: #{tpu_custom_call.1} parent=1 // pred_region
      _
    $region13: #{tpu_custom_call.1} parent=1 // pred_fallthru
      _
    // Predicated region
    $region14: #{tpu_custom_call.1} parent=1 // pred_check
      _
    $region15: #{tpu_custom_call.1} parent=1 // pred_check_branch
      %18 = sbr.rel (0) target = $region17
    $region16: #{tpu_custom_call.1} parent=1 // pred_region
      _
    $region17: #{tpu_custom_call.1} parent=1 // pred_fallthru
      _
    // Predicated region
    $region18: #{tpu_custom_call.1} parent=1 // pred_check
      _
    $region19: #{tpu_custom_call.1} parent=1 // pred_check_branch
      %20 = sbr.rel (0) target = $region21
    $region20: #{tpu_custom_call.1} parent=1 // pred_region
      _
    $region21: #{tpu_custom_call.1} parent=1 // pred_fallthru
      _
    %v21 = vld [vmem:[%s0] sm:$0xff]
    %v22 = vld [vmem:[%s4] sm:$0x1]
    %v23 = vld [vmem:[%s4 + $0x1] sm:$0x1]
    %v24 = vld [vmem:[%s4 + $0x2] sm:$0x1]
    %v25 = vld [vmem:[%s1] sm:$0xff]
    %v26 = vld [vmem:[%s1 + $0x8] sm:$0xff]
    %v27 = vld [vmem:[%s1 + $0x10] sm:$0xff]
    %v28 = vld [vmem:[%s1 + $0x18] sm:$0xff]
    %v29 = vlaneseq
    %v30 = vshrl.u32 %v29, 7
    %v31 = vsub.s32 0, %v30
    %v32 = vrot.slane %v22, %v31
    %vm33 = vcmask 261120
    %v35 = vsel %vm33, %v21, 0
    %37 = vmatprep.subr.mxu0 0.0
    %38 = vmatpush1.msra.mxu0 %v25
    %39 = vmatprep.subr.mxu0 0.0
    %40 = vmatpush1.msra.mxu0 %v26
    %41 = vmatprep.subr.mxu0 0.0
    %42 = vmatpush1.msra.mxu0 %v27
    %43 = vmatprep.subr.mxu0 0.0
    %44 = vmatpush1.msra.mxu0 %v28
    %45 = vmatprep.subr.mxu0 0.0
    %46 = vmatpush1.msra.mxu0 0.0
    %47 = vmatprep.subr.mxu0 0.0
    %48 = vmatpush1.msra.mxu0 0.0
    %49 = vmatprep.subr.mxu0 0.0
    %50 = vmatpush1.msra.mxu0 0.0
    %51 = vmatprep.subr.mxu0 0.0
    %52 = vmatpush1.msra.mxu0 0.0
    %53 = vmatprep.subr.mxu0 0.0
    %54 = vmatpush1.msra.mxu0 0.0
    %55 = vmatprep.subr.mxu0 0.0
    %56 = vmatpush1.msra.mxu0 0.0
    %57 = vmatprep.subr.mxu0 0.0
    %58 = vmatpush1.msra.mxu0 0.0
    %59 = vmatprep.subr.mxu0 0.0
    %60 = vmatpush1.msra.mxu0 0.0
    %61 = vmatprep.subr.mxu0 0.0
    %62 = vmatpush1.msra.mxu0 0.0
    %63 = vmatprep.subr.mxu0 0.0
    %64 = vmatpush1.msra.mxu0 0.0
    %65 = vmatprep.subr.mxu0 0.0
    %66 = vmatpush1.msra.mxu0 0.0
    %67 = vmatprep.subr.mxu0 0.0
    %68 = vmatpush1.msra.mxu0 0.0
    %69 = vmatprep.subr.mxu0 0.0
    %70 = vmatpush1.msra.mxu0 0.0
    %71 = vmatprep.subr.mxu0 0.0
    %72 = vmatpush1.msra.mxu0 0.0
    %73 = vmatprep.subr.mxu0 0.0
    %74 = vmatpush1.msra.mxu0 0.0
    %75 = vmatprep.subr.mxu0 0.0
    %76 = vmatpush1.msra.mxu0 0.0
    %77 = vmatprep.subr.mxu0 0.0
    %78 = vmatpush1.msra.mxu0 0.0
    %79 = vmatprep.subr.mxu0 0.0
    %80 = vmatpush1.msra.mxu0 0.0
    %81 = vmatprep.subr.mxu0 0.0
    %82 = vmatpush1.msra.mxu0 0.0
    %83 = vmatprep.subr.mxu0 0.0
    %84 = vmatpush1.msra.mxu0 0.0
    %85 = vmatprep.subr.mxu0 0.0
    %86 = vmatpush1.msra.mxu0 0.0
    %87 = vmatprep.subr.mxu0 0.0
    %88 = vmatpush1.msra.mxu0 0.0
    %89 = vmatprep.subr.mxu0 0.0
    %90 = vmatpush1.msra.mxu0 0.0
    %91 = vmatprep.subr.mxu0 0.0
    %92 = vmatpush1.msra.mxu0 0.0
    %93 = vmatprep.subr.mxu0 0.0
    %94 = vmatpush1.msra.mxu0 0.0
    %95 = vmatprep.subr.mxu0 0.0
    %96 = vmatpush1.msra.mxu0 0.0
    %97 = vmatprep.subr.mxu0 0.0
    %98 = vmatpush1.msra.mxu0 0.0
    %99 = vmatprep.subr.mxu0 0.0
    %100 = vmatpush1.msra.mxu0 0.0
    %101 = vmatprep.mubr.f32.mxu0 0.0
    %102 = vmatmul.mubr.f32.gmra.mrb[0].mxu0 %v35
    %v103 = vpop.f32.mrb[0].mxu0
    %v104 = vadd.f32 %v32, %v103
    %v105 = vpop.f32.mrb[0].mxu0
    %106 = vdwg.mxu0
    %v107 = vmin.f32 %v104, 0.0
    %v108 = vand.u32 2147483647, %v104
    %v109 = vsub.f32 0.0, %v108
    %v110 = vmul.f32 %v109, 1.442695
    %v111 = vpow.pop %v110
    %v112 = vadd.f32 %v111, 1.0
    %v113 = vlog2.pop %v112
    %v114 = vmul.f32 %v113, 0.6931472
    %v115 = vmul.f32 -0.5, %v111
    %v116 = vadd.f32 %v115, 1.0
    %v117 = vmul.f32 %v116, %v111
    %v118 = vand.u32 2147483647, %v111
    %vm119 = vcmp.lt.f32.partialorder %v118, 0.0004427343
    %v120 = vsel %vm119, %v117, %v114
    %v121 = vsub.f32 %v107, %v120
    %v122 = vld [vmem:[%s2] sm:$0xff]
    %v123 = vld [vmem:[%s2 + $0x8] sm:$0xff]
    %v124 = vld [vmem:[%s2 + $0x10] sm:$0xff]
    %v125 = vld [vmem:[%s2 + $0x18] sm:$0xff]
    %v126 = vld [vmem:[%s2 + $0x20] sm:$0xff]
    %v127 = vld [vmem:[%s2 + $0x28] sm:$0xff]
    %v128 = vld [vmem:[%s2 + $0x30] sm:$0xff]
    %v129 = vld [vmem:[%s2 + $0x38] sm:$0xff]
    %v130 = vld [vmem:[%s2 + $0x40] sm:$0xff]
    %v131 = vld [vmem:[%s2 + $0x48] sm:$0xff]
    %v132 = vld [vmem:[%s2 + $0x50] sm:$0xff]
    %v133 = vld [vmem:[%s2 + $0x58] sm:$0xff]
    %v134 = vld [vmem:[%s2 + $0x60] sm:$0xff]
    %v135 = vld [vmem:[%s2 + $0x68] sm:$0xff]
    %v136 = vld [vmem:[%s2 + $0x70] sm:$0xff]
    %v137 = vld [vmem:[%s2 + $0x78] sm:$0xff]
    %v138 = vlaneseq
    %v139 = vshrl.u32 %v138, 7
    %v140 = vsub.s32 0, %v139
    %v141 = vrot.slane %v23, %v140
    %142 = vmatprep.subr.mxu0 0.0
    %143 = vmatpush1.msra.mxu0 %v122
    %144 = vmatprep.subr.mxu0 0.0
    %145 = vmatpush1.msra.mxu0 %v123
    %146 = vmatprep.subr.mxu0 0.0
    %147 = vmatpush1.msra.mxu0 %v124
    %148 = vmatprep.subr.mxu0 0.0
    %149 = vmatpush1.msra.mxu0 %v125
    %150 = vmatprep.subr.mxu0 0.0
    %151 = vmatpush1.msra.mxu0 %v126
    %152 = vmatprep.subr.mxu0 0.0
    %153 = vmatpush1.msra.mxu0 %v127
    %154 = vmatprep.subr.mxu0 0.0
    %155 = vmatpush1.msra.mxu0 %v128
    %156 = vmatprep.subr.mxu0 0.0
    %157 = vmatpush1.msra.mxu0 %v129
    %158 = vmatprep.subr.mxu0 0.0
    %159 = vmatpush1.msra.mxu0 %v130
    %160 = vmatprep.subr.mxu0 0.0
    %161 = vmatpush1.msra.mxu0 %v131
    %162 = vmatprep.subr.mxu0 0.0
    %163 = vmatpush1.msra.mxu0 %v132
    %164 = vmatprep.subr.mxu0 0.0
    %165 = vmatpush1.msra.mxu0 %v133
    %166 = vmatprep.subr.mxu0 0.0
    %167 = vmatpush1.msra.mxu0 %v134
    %168 = vmatprep.subr.mxu0 0.0
    %169 = vmatpush1.msra.mxu0 %v135
    %170 = vmatprep.subr.mxu0 0.0
    %171 = vmatpush1.msra.mxu0 %v136
    %172 = vmatprep.subr.mxu0 0.0
    %173 = vmatpush1.msra.mxu0 %v137
    %174 = vmatprep.subr.mxu0 0.0
    %175 = vmatpush1.msra.mxu0 0.0
    %176 = vmatprep.subr.mxu0 0.0
    %177 = vmatpush1.msra.mxu0 0.0
    %178 = vmatprep.subr.mxu0 0.0
    %179 = vmatpush1.msra.mxu0 0.0
    %180 = vmatprep.subr.mxu0 0.0
    %181 = vmatpush1.msra.mxu0 0.0
    %182 = vmatprep.subr.mxu0 0.0
    %183 = vmatpush1.msra.mxu0 0.0
    %184 = vmatprep.subr.mxu0 0.0
    %185 = vmatpush1.msra.mxu0 0.0
    %186 = vmatprep.subr.mxu0 0.0
    %187 = vmatpush1.msra.mxu0 0.0
    %188 = vmatprep.subr.mxu0 0.0
    %189 = vmatpush1.msra.mxu0 0.0
    %190 = vmatprep.subr.mxu0 0.0
    %191 = vmatpush1.msra.mxu0 0.0
    %192 = vmatprep.subr.mxu0 0.0
    %193 = vmatpush1.msra.mxu0 0.0
    %194 = vmatprep.subr.mxu0 0.0
    %195 = vmatpush1.msra.mxu0 0.0
    %196 = vmatprep.subr.mxu0 0.0
    %197 = vmatpush1.msra.mxu0 0.0
    %198 = vmatprep.subr.mxu0 0.0
    %199 = vmatpush1.msra.mxu0 0.0
    %200 = vmatprep.subr.mxu0 0.0
    %201 = vmatpush1.msra.mxu0 0.0
    %202 = vmatprep.subr.mxu0 0.0
    %203 = vmatpush1.msra.mxu0 0.0
    %204 = vmatprep.subr.mxu0 0.0
    %205 = vmatpush1.msra.mxu0 0.0
    %206 = vmatprep.mubr.f32.mxu0 0.0
    %207 = vmatmul.mubr.f32.gmra.mrb[0].mxu0 %v121
    %v208 = vpop.f32.mrb[0].mxu0
    %v209 = vadd.f32 %v141, %v208
    %v210 = vpop.f32.mrb[0].mxu0
    %211 = vdwg.mxu0
    %v212 = vmin.f32 %v209, 0.0
    %v213 = vand.u32 2147483647, %v209
    %v214 = vsub.f32 0.0, %v213
    %v215 = vmul.f32 %v214, 1.442695
    %v216 = vpow.pop %v215
    %v217 = vadd.f32 %v216, 1.0
    %v218 = vlog2.pop %v217
    %v219 = vmul.f32 %v218, 0.6931472
    %v220 = vmul.f32 -0.5, %v216
    %v221 = vadd.f32 %v220, 1.0
    %v222 = vmul.f32 %v221, %v216
    %v223 = vand.u32 2147483647, %v216
    %vm224 = vcmp.lt.f32.partialorder %v223, 0.0004427343
    %v225 = vsel %vm224, %v222, %v219
    %v226 = vsub.f32 %v212, %v225
    %v227 = vld [vmem:[%s3] sm:$0xff]
    %v228 = vld [vmem:[%s3 + $0x8] sm:$0xff]
    %v229 = vld [vmem:[%s3 + $0x10] sm:$0xff]
    %v230 = vld [vmem:[%s3 + $0x18] sm:$0xff]
    %v231 = vld [vmem:[%s3 + $0x20] sm:$0xff]
    %v232 = vld [vmem:[%s3 + $0x28] sm:$0xff]
    %v233 = vld [vmem:[%s3 + $0x30] sm:$0xff]
    %v234 = vld [vmem:[%s3 + $0x38] sm:$0xff]
    %v235 = vlaneseq
    %v236 = vshrl.u32 %v235, 7
    %v237 = vsub.s32 0, %v236
    %v238 = vrot.slane %v24, %v237
    %vm239 = vcmask 523264
    %v241 = vsel %vm239, %v226, 0
    %243 = vmatprep.subr.mxu0 0.0
    %244 = vmatpush1.msra.mxu0 %v227
    %245 = vmatprep.subr.mxu0 0.0
    %246 = vmatpush1.msra.mxu0 %v228
    %247 = vmatprep.subr.mxu0 0.0
    %248 = vmatpush1.msra.mxu0 %v229
    %249 = vmatprep.subr.mxu0 0.0
    %250 = vmatpush1.msra.mxu0 %v230
    %251 = vmatprep.subr.mxu0 0.0
    %252 = vmatpush1.msra.mxu0 %v231
    %253 = vmatprep.subr.mxu0 0.0
    %254 = vmatpush1.msra.mxu0 %v232
    %255 = vmatprep.subr.mxu0 0.0
    %256 = vmatpush1.msra.mxu0 %v233
    %257 = vmatprep.subr.mxu0 0.0
    %258 = vmatpush1.msra.mxu0 %v234
    %259 = vmatprep.subr.mxu0 0.0
    %260 = vmatpush1.msra.mxu0 0.0
    %261 = vmatprep.subr.mxu0 0.0
    %262 = vmatpush1.msra.mxu0 0.0
    %263 = vmatprep.subr.mxu0 0.0
    %264 = vmatpush1.msra.mxu0 0.0
    %265 = vmatprep.subr.mxu0 0.0
    %266 = vmatpush1.msra.mxu0 0.0
    %267 = vmatprep.subr.mxu0 0.0
    %268 = vmatpush1.msra.mxu0 0.0
    %269 = vmatprep.subr.mxu0 0.0
    %270 = vmatpush1.msra.mxu0 0.0
    %271 = vmatprep.subr.mxu0 0.0
    %272 = vmatpush1.msra.mxu0 0.0
    %273 = vmatprep.subr.mxu0 0.0
    %274 = vmatpush1.msra.mxu0 0.0
    %275 = vmatprep.subr.mxu0 0.0
    %276 = vmatpush1.msra.mxu0 0.0
    %277 = vmatprep.subr.mxu0 0.0
    %278 = vmatpush1.msra.mxu0 0.0
    %279 = vmatprep.subr.mxu0 0.0
    %280 = vmatpush1.msra.mxu0 0.0
    %281 = vmatprep.subr.mxu0 0.0
    %282 = vmatpush1.msra.mxu0 0.0
    %283 = vmatprep.subr.mxu0 0.0
    %284 = vmatpush1.msra.mxu0 0.0
    %285 = vmatprep.subr.mxu0 0.0
    %286 = vmatpush1.msra.mxu0 0.0
    %287 = vmatprep.subr.mxu0 0.0
    %288 = vmatpush1.msra.mxu0 0.0
    %289 = vmatprep.subr.mxu0 0.0
    %290 = vmatpush1.msra.mxu0 0.0
    %291 = vmatprep.subr.mxu0 0.0
    %292 = vmatpush1.msra.mxu0 0.0
    %293 = vmatprep.subr.mxu0 0.0
    %294 = vmatpush1.msra.mxu0 0.0
    %295 = vmatprep.subr.mxu0 0.0
    %296 = vmatpush1.msra.mxu0 0.0
    %297 = vmatprep.subr.mxu0 0.0
    %298 = vmatpush1.msra.mxu0 0.0
    %299 = vmatprep.subr.mxu0 0.0
    %300 = vmatpush1.msra.mxu0 0.0
    %301 = vmatprep.subr.mxu0 0.0
    %302 = vmatpush1.msra.mxu0 0.0
    %303 = vmatprep.subr.mxu0 0.0
    %304 = vmatpush1.msra.mxu0 0.0
    %305 = vmatprep.subr.mxu0 0.0
    %306 = vmatpush1.msra.mxu0 0.0
    %307 = vmatprep.mubr.f32.mxu0 0.0
    %308 = vmatmul.mubr.f32.gmra.mrb[0].mxu0 %v241
    %v309 = vpop.f32.mrb[0].mxu0
    %v310 = vadd.f32 %v238, %v309
    %v311 = vpop.f32.mrb[0].mxu0
    %312 = vdwg.mxu0
    %v313 = vand.u32 2147483647, %v310
    %v314 = vsub.f32 0.0, %v313
    %v315 = vmul.f32 %v314, 1.442695
    %v316 = vpow.pop %v315
    %v317 = vadd.f32 %v316, 1.0
    %v318 = vrcp.pop %v317
    %v319 = vmul.f32 %v317, %v318
    %v320 = vsub.f32 2.0, %v319
    %v321 = vmul.f32 %v318, %v320
    %vm322 = vcmp.ge.f32.partialorder %v310, 0.0
    %v323 = vmul.f32 %v316, %v321
    %v324 = vsel %vm322, %v321, %v323
    %v325 = vlaneseq
    %v326 = vand.u32 %v325, 127
    %vm327 = vcmp.lt.s32.totalorder %v326, 10
    %v328 = vsel %vm327, %v324, 0.0
    %329 = vadd.xlane.f32.xlu0 %v328
    %v330 = vpop.xlane.xlu0 %329
    %v331 = vrcp.pop %v330
    %v332 = vmul.f32 %v330, %v331
    %v333 = vsub.f32 2.0, %v332
    %v334 = vmul.f32 %v331, %v333
    %v335 = vmul.f32 %v328, %v334
    %vm336 = vcmask 80896
    %337 = vst.msk [vmem:[#allocation2] sm:$0xff] %vm336, %v335
    // Predicated region
    $region22: #{tpu_custom_call.1} parent=1 // pred_check
      _
    $region23: #{tpu_custom_call.1} parent=1 // pred_check_branch
      %339 = sbr.rel (0) target = $region25
    $region24: #{tpu_custom_call.1} parent=1 // pred_region
      %s341 = ssub.s32 128, 128
      %342 = vsyncadd [#allocation3], %s341
      %s344 = sshll.u32 [#allocation2], 4
      %s345 = int_to_ptr.vmem [resolvable:$true] %s344
      %347 = dma.vmem_to_hbm [thread:$0]  %s345, 128, %s5, [#allocation3]
    $region25: #{tpu_custom_call.1} parent=1 // pred_fallthru
      _
    // Predicated region
    $region26: #{tpu_custom_call.1} parent=1 // pred_check
      _
    $region27: #{tpu_custom_call.1} parent=1 // pred_check_branch
      %349 = sbr.rel (0) target = $region29
    $region28: #{tpu_custom_call.1} parent=1 // pred_region
      %350 = dma.done [#allocation3], 128
    $region29: #{tpu_custom_call.1} parent=1 // pred_fallthru
      _
    %351 = vsyncpa [#allocation3], 1

</llo_original>
